<compile_context>
chip_gen: v7x
topology: tpu7x:2x2x1
jax: 0.10.0
libtpu: 0.0.40
codegen_flags: <defaults>
</compile_context>

<pallas_src>
import functools

import jax
import jax.numpy as jnp
from jax import lax
from jax.experimental import pallas as pl
from jax.experimental.pallas import tpu as pltpu


# -----------------------------------------------------------------------------
# Fused kernel.  Grid = (batch_tiles, row_chunks); one im2col matmul per step,
# GAP partial sums accumulated in VMEM scratch, head runs on the last r step.
# -----------------------------------------------------------------------------
def fused_isic_kernel(x_ref, wc_ref, bc_ref, w1_ref, b1_ref, w2_ref, b2_ref,
                      o_ref, acc_ref, *, batch_tile, row_chunk, inv_hw):
    r = pl.program_id(1)

    @pl.when(r == 0)
    def _():
        acc_ref[...] = jnp.zeros_like(acc_ref)

    # ---- Conv stem: ONE im2col matmul per step ------------------------------
    # x block: (batch_tile, row_chunk, 9*cin) bf16.  Collapsing the leading
    # batch dim into M is layout-free (row_chunk is a multiple of 16, or the
    # full H*W extent).  M = batch_tile*row_chunk, K = 9*cin, N = fts_pad.
    kc = x_ref.shape[-1]
    x2 = x_ref[...].reshape(batch_tile * row_chunk, kc)
    conv = jnp.dot(x2, wc_ref[...], preferred_element_type=jnp.float32)
    conv = jnp.maximum(conv + bc_ref[...], 0.0)           # bias + ReLU (f32)

    # ---- Partial GAP sums per image (2-D sublane reductions) ----------------
    parts = [
        jnp.sum(conv[i * row_chunk:(i + 1) * row_chunk, :], axis=0,
                keepdims=True)
        for i in range(batch_tile)
    ]
    acc_ref[...] += jnp.concatenate(parts, axis=0)        # (batch_tile, F)

    # ---- Head on the last row-chunk step (M = batch_tile) -------------------
    @pl.when(r == pl.num_programs(1) - 1)
    def _():
        pooled = acc_ref[...] * inv_hw                    # GAP mean
        h = jnp.dot(pooled, w1_ref[...],
                    preferred_element_type=jnp.float32) + b1_ref[...]
        h = jnp.where(h >= 0.0, h, 0.1 * h)               # LeakyReLU(0.1)
        o_ref[...] = (jnp.dot(h, w2_ref[...],
                              preferred_element_type=jnp.float32)
                      + b2_ref[...]).astype(o_ref.dtype)


def _pick_tile(total, cap, align):
    """Largest divisor of `total` that is <= cap and a multiple of `align`.

    Falls back to `total` itself (block == full extent, always layout-legal).
    """
    best = None
    hi = min(total, cap)
    for d in range(align, hi + 1, align):
        if total % d == 0:
            best = d
    return best if best is not None else total


def isic_forward(x_nchw, params):
    """Forward pass matching ISICModel.forward (eval-mode BN / Dropout)."""
    eps = 1e-5
    n, cin, h, w = x_nchw.shape
    hw = h * w
    kc = 9 * cin
    nb_fts = params["conv_w"].shape[-1]
    hidden = params["w1"].shape[-1]
    out_chans = params["w2"].shape[-1]

    fts_pad = ((nb_fts + 127) // 128) * 128       # lane-dense conv features
    out_pad = ((out_chans + 127) // 128) * 128    # lane-dense output width

    # ---- Wrapper-side im2col: lane axis = 9*cin, zero in-kernel relayouts ---
    x_nhwc = jnp.transpose(x_nchw, (0, 2, 3, 1)).astype(jnp.float32)
    x_p = jnp.pad(x_nhwc, ((0, 0), (1, 1), (1, 1), (0, 0)))
    taps = [x_p[:, di:di + h, dj:dj + w, :]
            for di in range(3) for dj in range(3)]          # tap = 3*di + dj
    patches = (jnp.concatenate(taps, axis=-1)               # (N, H, W, 9*cin)
               .reshape(n, hw, kc).astype(jnp.bfloat16))

    # ---- Weights: BN folded into Linear1, everything padded lane-dense ------
    conv_w = jnp.zeros((kc, fts_pad), jnp.bfloat16).at[:, :nb_fts].set(
        params["conv_w"].astype(jnp.bfloat16))
    conv_b = jnp.zeros((1, fts_pad), jnp.float32).at[:, :nb_fts].set(
        params["conv_b"].astype(jnp.float32))
    scale = params["gamma"] * lax.rsqrt(params["run_var"] + eps)     # (1, hidden)
    w1f = (params["w1"] * scale).astype(jnp.float32)                  # (nb_fts, hidden)
    b1f = ((params["b1"] - params["run_mean"]) * scale
           + params["beta"]).astype(jnp.float32)                      # (1, hidden)
    w1p = jnp.zeros((fts_pad, hidden), jnp.float32).at[:nb_fts, :].set(w1f)
    w2p = jnp.zeros((hidden, out_pad), jnp.float32).at[:, :out_chans].set(params["w2"])
    b2p = jnp.zeros((1, out_pad), jnp.float32).at[:, :out_chans].set(params["b2"])

    # ---- Tiling: batch folded into M; row chunks keep VMEM blocks small -----
    batch_tile = _pick_tile(n, 8, 1)              # head / GAP M dimension
    row_chunk = _pick_tile(hw, 1024, 16)          # multiple of 16 (bf16 packing)
    n_bt = n // batch_tile
    n_rc = hw // row_chunk

    kernel = functools.partial(fused_isic_kernel, batch_tile=batch_tile,
                               row_chunk=row_chunk, inv_hw=1.0 / hw)

    flops = (2 * n * hw * kc * fts_pad
             + 2 * n * (fts_pad * hidden + hidden * out_pad))
    bytes_accessed = (patches.size * 2 + conv_w.size * 2
                      + (conv_b.size + w1p.size + b1f.size
                         + w2p.size + b2p.size) * 4
                      + n * out_pad * 4)

    y_pad = pl.pallas_call(
        kernel,
        out_shape=jax.ShapeDtypeStruct((n_bt, batch_tile, out_pad), jnp.float32),
        grid_spec=pltpu.PrefetchScalarGridSpec(
            num_scalar_prefetch=0,
            grid=(n_bt, n_rc),                                 # reduction axis last
            in_specs=[
                pl.BlockSpec((batch_tile, row_chunk, kc),
                             lambda b, r: (b, r, 0)),          # im2col patches bf16
                pl.BlockSpec((kc, fts_pad), lambda b, r: (0, 0)),     # conv_w bf16
                pl.BlockSpec((1, fts_pad), lambda b, r: (0, 0)),      # conv_b f32
                pl.BlockSpec((fts_pad, hidden), lambda b, r: (0, 0)), # w1 (BN folded)
                pl.BlockSpec((1, hidden), lambda b, r: (0, 0)),       # b1 (BN folded)
                pl.BlockSpec((hidden, out_pad), lambda b, r: (0, 0)), # w2 (padded)
                pl.BlockSpec((1, out_pad), lambda b, r: (0, 0)),      # b2 (padded)
            ],
            out_specs=pl.BlockSpec((None, batch_tile, out_pad),
                                   lambda b, r: (b, 0, 0)),    # resident across r
            scratch_shapes=[pltpu.VMEM((batch_tile, fts_pad), jnp.float32)],
        ),
        compiler_params=pltpu.CompilerParams(
            dimension_semantics=("parallel", "arbitrary"),     # batch tiles // 2 TCs
            vmem_limit_bytes=32 * 1024 * 1024),
        cost_estimate=pl.CostEstimate(flops=int(flops), transcendentals=0,
                                      bytes_accessed=int(bytes_accessed)),
    )(patches, conv_w, conv_b, w1p, b1f, w2p, b2p)

    return y_pad.reshape(n, out_pad)[:, :out_chans]


# -----------------------------------------------------------------------------
# Pure-JAX f32 reference with identical semantics (BN NOT pre-folded).
# -----------------------------------------------------------------------------
def reference_forward(x_nchw, params):
    eps = 1e-5
    x_nhwc = jnp.transpose(x_nchw, (0, 2, 3, 1)).astype(jnp.float32)
    n, h, w, cin = x_nhwc.shape
    nb_fts = params["conv_w"].shape[-1]
    w_hwio = params["conv_w"].reshape(3, 3, cin, nb_fts)
    feat = lax.conv_general_dilated(
        x_nhwc, w_hwio, window_strides=(1, 1), padding="SAME",
        dimension_numbers=("NHWC", "HWIO", "NHWC"))
    feat = jnp.maximum(feat + params["conv_b"][0], 0.0)
    pooled = jnp.mean(feat, axis=(1, 2))                            # GAP
    hh = pooled @ params["w1"] + params["b1"][0]
    hh = (hh - params["run_mean"][0]) * lax.rsqrt(params["run_var"][0] + eps) \
         * params["gamma"][0] + params["beta"][0]
    hh = jnp.where(hh >= 0, hh, 0.1 * hh)
    return hh @ params["w2"] + params["b2"][0]


def make_params(key, cin=3, nb_fts=32, hidden=128, out_chans=2):
    ks = jax.random.split(key, 8)
    return {
        "conv_w": 0.1 * jax.random.normal(ks[0], (9 * cin, nb_fts), jnp.float32),
        "conv_b": 0.1 * jax.random.normal(ks[1], (1, nb_fts), jnp.float32),
        "w1": 0.1 * jax.random.normal(ks[2], (nb_fts, hidden), jnp.float32),
        "b1": 0.1 * jax.random.normal(ks[3], (1, hidden), jnp.float32),
        "gamma": 1.0 + 0.1 * jax.random.normal(ks[4], (1, hidden), jnp.float32),
        "beta": 0.1 * jax.random.normal(ks[5], (1, hidden), jnp.float32),
        "run_mean": 0.05 * jax.random.normal(ks[6], (1, hidden), jnp.float32),
        "run_var": jnp.abs(1.0 + 0.1 * jax.random.normal(ks[7], (1, hidden),
                                                         jnp.float32)),
        "w2": 0.1 * jax.random.normal(jax.random.fold_in(key, 99),
                                      (hidden, out_chans), jnp.float32),
        "b2": 0.1 * jax.random.normal(jax.random.fold_in(key, 100),
                                      (1, out_chans), jnp.float32),
    }


if __name__ == "__main__":
    key = jax.random.PRNGKey(0)
    k_x, k_p = jax.random.split(key)

    # Small shapes consistent with the module: NCHW images, in_chans=3.
    N, C, H, W = 2, 3, 16, 16
    x = jax.random.normal(k_x, (N, C, H, W), jnp.float32)
    params = make_params(k_p, cin=C, nb_fts=32, hidden=128, out_chans=2)

    y = jax.block_until_ready(isic_forward(x, params))
    y_ref = jax.block_until_ready(reference_forward(x, params))

    assert y.shape == (N, 2), y.shape
    # bf16 conv-matmul inputs (f32 accumulation) -> looser tolerance than f32.
    assert jnp.allclose(y, y_ref, atol=3e-2, rtol=3e-2), (y, y_ref)
    print("KERNEL_OK")
</pallas_src>

<mosaic_0001>
module attributes {stable_mosaic.version = 11 : i64} {
  func.func @fused_isic_kernel(%arg0: i32, %arg1: i32, %arg2: memref<2x256x27xbf16, #tpu.memory_space<vmem>>, %arg3: memref<27x128xbf16, #tpu.memory_space<vmem>>, %arg4: memref<1x128xf32, #tpu.memory_space<vmem>>, %arg5: memref<128x128xf32, #tpu.memory_space<vmem>>, %arg6: memref<1x128xf32, #tpu.memory_space<vmem>>, %arg7: memref<128x128xf32, #tpu.memory_space<vmem>>, %arg8: memref<1x128xf32, #tpu.memory_space<vmem>>, %arg9: memref<1x2x128xf32, #tpu.memory_space<vmem>>, %arg10: memref<2x128xf32, #tpu.memory_space<vmem>>) attributes {dimension_semantics = [#tpu.dimension_semantics<parallel>, #tpu.dimension_semantics<arbitrary>], iteration_bounds = array<i64: 1, 1>, scalar_prefetch = 0 : i64, scratch_operands = 1 : i64, tpu.core_type = #tpu.core_type<tc>, window_params = [{transform_indices = @transform_0, window_bounds = array<i64: 2, 256, 27>}, {pipeline_mode = #tpu.pipeline_mode<synchronous>, transform_indices = @transform_1, window_bounds = array<i64: 27, 128>}, {pipeline_mode = #tpu.pipeline_mode<synchronous>, transform_indices = @transform_2, window_bounds = array<i64: 1, 128>}, {pipeline_mode = #tpu.pipeline_mode<synchronous>, transform_indices = @transform_3, window_bounds = array<i64: 128, 128>}, {pipeline_mode = #tpu.pipeline_mode<synchronous>, transform_indices = @transform_4, window_bounds = array<i64: 1, 128>}, {pipeline_mode = #tpu.pipeline_mode<synchronous>, transform_indices = @transform_5, window_bounds = array<i64: 128, 128>}, {pipeline_mode = #tpu.pipeline_mode<synchronous>, transform_indices = @transform_6, window_bounds = array<i64: 1, 128>}, {transform_indices = @transform_7, window_bounds = array<i64: 1, 2, 128>}]} {
    %c0_i32 = arith.constant 0 : i32
    %0 = arith.cmpi eq, %arg1, %c0_i32 : i32
    %1 = arith.extui %0 : i1 to i32
    %c0_i32_0 = arith.constant 0 : i32
    %2 = arith.cmpi ne, %1, %c0_i32_0 : i32
    scf.if %2 {
      %cst_16 = arith.constant 0.000000e+00 : f32
      %25 = vector.broadcast %cst_16 : f32 to vector<2x128xf32>
      %c0_17 = arith.constant 0 : index
      %c0_18 = arith.constant 0 : index
      %26 = vector.load %arg10[%c0_17, %c0_18] : memref<2x128xf32, #tpu.memory_space<vmem>>, vector<2x128xf32>
      tpu.vector_store %arg10[%c0_17, %c0_18], %25 {strides = array<i32>} : memref<2x128xf32, #tpu.memory_space<vmem>>, vector<2x128xf32>,
    } else {
    }
    %c0 = arith.constant 0 : index
    %c0_1 = arith.constant 0 : index
    %c0_2 = arith.constant 0 : index
    %3 = vector.load %arg2[%c0, %c0_1, %c0_2] : memref<2x256x27xbf16, #tpu.memory_space<vmem>>, vector<2x256x27xbf16>
    %4 = vector.shape_cast %3 : vector<2x256x27xbf16> to vector<512x27xbf16>
    %c0_3 = arith.constant 0 : index
    %c0_4 = arith.constant 0 : index
    %5 = vector.load %arg3[%c0_3, %c0_4] : memref<27x128xbf16, #tpu.memory_space<vmem>>, vector<27x128xbf16>
    %cst = arith.constant dense<0.000000e+00> : vector<512x128xf32>
    %6 = tpu.matmul %4, %5, %cst {dimension_numbers = #tpu.dot_dimension_numbers<[1], [0], [0], [1], [0, 0, 1, 1], [], []>} : vector<512x27xbf16>, vector<27x128xbf16>, vector<512x128xf32> -> vector<512x128xf32>
    %c0_5 = arith.constant 0 : index
    %c0_6 = arith.constant 0 : index
    %7 = vector.load %arg4[%c0_5, %c0_6] : memref<1x128xf32, #tpu.memory_space<vmem>>, vector<1x128xf32>
    %8 = vector.broadcast %7 : vector<1x128xf32> to vector<512x128xf32>
    %9 = arith.addf %6, %8 : vector<512x128xf32>
    %cst_7 = arith.constant 0.000000e+00 : f32
    %10 = vector.broadcast %cst_7 : f32 to vector<512x128xf32>
    %11 = arith.maximumf %9, %10 : vector<512x128xf32>
    %12 = vector.extract_strided_slice %11 {offsets = [0, 0], sizes = [256, 128], strides = [1, 1]} : vector<512x128xf32> to vector<256x128xf32>
    %cst_8 = arith.constant dense<0.000000e+00> : vector<128xf32>
    %13 = vector.multi_reduction <add>, %12, %cst_8 [0] : vector<256x128xf32> to vector<128xf32>
    %14 = vector.shape_cast %13 : vector<128xf32> to vector<1x128xf32>
    %15 = vector.extract_strided_slice %11 {offsets = [256, 0], sizes = [256, 128], strides = [1, 1]} : vector<512x128xf32> to vector<256x128xf32>
    %cst_9 = arith.constant dense<0.000000e+00> : vector<128xf32>
    %16 = vector.multi_reduction <add>, %15, %cst_9 [0] : vector<256x128xf32> to vector<128xf32>
    %17 = vector.shape_cast %16 : vector<128xf32> to vector<1x128xf32>
    %c0_10 = arith.constant 0 : index
    %c0_11 = arith.constant 0 : index
    %18 = vector.load %arg10[%c0_10, %c0_11] : memref<2x128xf32, #tpu.memory_space<vmem>>, vector<2x128xf32>
    %19 = tpu.concatenate %14, %17 in 0 : vector<1x128xf32>, vector<1x128xf32> -> vector<2x128xf32>
    %20 = arith.addf %18, %19 : vector<2x128xf32>
    %c0_12 = arith.constant 0 : index
    %c0_13 = arith.constant 0 : index
    %21 = vector.load %arg10[%c0_12, %c0_13] : memref<2x128xf32, #tpu.memory_space<vmem>>, vector<2x128xf32>
    tpu.vector_store %arg10[%c0_12, %c0_13], %20 {strides = array<i32>} : memref<2x128xf32, #tpu.memory_space<vmem>>, vector<2x128xf32>,
    %c0_i32_14 = arith.constant 0 : i32
    %22 = arith.cmpi eq, %arg1, %c0_i32_14 : i32
    %23 = arith.extui %22 : i1 to i32
    %c0_i32_15 = arith.constant 0 : i32
    %24 = arith.cmpi ne, %23, %c0_i32_15 : i32
    scf.if %24 {
      %c0_16 = arith.constant 0 : index
      %c0_17 = arith.constant 0 : index
      %25 = vector.load %arg10[%c0_16, %c0_17] : memref<2x128xf32, #tpu.memory_space<vmem>>, vector<2x128xf32>
      %cst_18 = arith.constant 3.906250e-03 : f32
      %26 = vector.broadcast %cst_18 : f32 to vector<2x128xf32>
      %27 = arith.mulf %25, %26 : vector<2x128xf32>
      %c0_19 = arith.constant 0 : index
      %c0_20 = arith.constant 0 : index
      %28 = vector.load %arg5[%c0_19, %c0_20] : memref<128x128xf32, #tpu.memory_space<vmem>>, vector<128x128xf32>
      %cst_21 = arith.constant dense<0.000000e+00> : vector<2x128xf32>
      %29 = tpu.matmul %27, %28, %cst_21 {dimension_numbers = #tpu.dot_dimension_numbers<[1], [0], [0], [1], [0, 0, 1, 1], [], []>} : vector<2x128xf32>, vector<128x128xf32>, vector<2x128xf32> -> vector<2x128xf32>
      %c0_22 = arith.constant 0 : index
      %c0_23 = arith.constant 0 : index
      %30 = vector.load %arg6[%c0_22, %c0_23] : memref<1x128xf32, #tpu.memory_space<vmem>>, vector<1x128xf32>
      %31 = vector.broadcast %30 : vector<1x128xf32> to vector<2x128xf32>
      %32 = arith.addf %29, %31 : vector<2x128xf32>
      %cst_24 = arith.constant 0.000000e+00 : f32
      %33 = vector.broadcast %cst_24 : f32 to vector<2x128xf32>
      %34 = arith.cmpf oge, %32, %33 : vector<2x128xf32>
      %cst_25 = arith.constant 1.000000e-01 : f32
      %35 = vector.broadcast %cst_25 : f32 to vector<2x128xf32>
      %36 = arith.mulf %35, %32 : vector<2x128xf32>
      %37 = arith.select %34, %32, %36 : vector<2x128xi1>, vector<2x128xf32>
      %c0_26 = arith.constant 0 : index
      %c0_27 = arith.constant 0 : index
      %38 = vector.load %arg7[%c0_26, %c0_27] : memref<128x128xf32, #tpu.memory_space<vmem>>, vector<128x128xf32>
      %cst_28 = arith.constant dense<0.000000e+00> : vector<2x128xf32>
      %39 = tpu.matmul %37, %38, %cst_28 {dimension_numbers = #tpu.dot_dimension_numbers<[1], [0], [0], [1], [0, 0, 1, 1], [], []>} : vector<2x128xf32>, vector<128x128xf32>, vector<2x128xf32> -> vector<2x128xf32>
      %c0_29 = arith.constant 0 : index
      %c0_30 = arith.constant 0 : index
      %40 = vector.load %arg8[%c0_29, %c0_30] : memref<1x128xf32, #tpu.memory_space<vmem>>, vector<1x128xf32>
      %41 = vector.broadcast %40 : vector<1x128xf32> to vector<2x128xf32>
      %42 = arith.addf %39, %41 : vector<2x128xf32>
      %c0_31 = arith.constant 0 : index
      %c0_32 = arith.constant 0 : index
      %c0_33 = arith.constant 0 : index
      %43 = vector.load %arg9[%c0_31, %c0_32, %c0_33] : memref<1x2x128xf32, #tpu.memory_space<vmem>>, vector<1x2x128xf32>
      %44 = vector.shape_cast %43 : vector<1x2x128xf32> to vector<2x128xf32>
      %45 = vector.shape_cast %42 : vector<2x128xf32> to vector<1x2x128xf32>
      tpu.vector_store %arg9[%c0_31, %c0_32, %c0_33], %45 {strides = array<i32>} : memref<1x2x128xf32, #tpu.memory_space<vmem>>, vector<1x2x128xf32>,
    } else {
    }
    return
  }
  func.func @transform_0(%arg0: i32, %arg1: i32) -> (i32, i32, i32) {
    %c0_i32 = arith.constant 0 : i32
    %c0_i32_0 = arith.constant 0 : i32
    return %arg0, %arg1, %c0_i32 : i32, i32, i32
  }
  func.func @transform_1(%arg0: i32, %arg1: i32) -> (i32, i32) {
    %c0_i32 = arith.constant 0 : i32
    %c0_i32_0 = arith.constant 0 : i32
    %c0_i32_1 = arith.constant 0 : i32
    return %c0_i32, %c0_i32_0 : i32, i32
  }
  func.func @transform_2(%arg0: i32, %arg1: i32) -> (i32, i32) {
    %c0_i32 = arith.constant 0 : i32
    %c0_i32_0 = arith.constant 0 : i32
    %c0_i32_1 = arith.constant 0 : i32
    return %c0_i32, %c0_i32_0 : i32, i32
  }
  func.func @transform_3(%arg0: i32, %arg1: i32) -> (i32, i32) {
    %c0_i32 = arith.constant 0 : i32
    %c0_i32_0 = arith.constant 0 : i32
    %c0_i32_1 = arith.constant 0 : i32
    return %c0_i32, %c0_i32_0 : i32, i32
  }
  func.func @transform_4(%arg0: i32, %arg1: i32) -> (i32, i32) {
    %c0_i32 = arith.constant 0 : i32
    %c0_i32_0 = arith.constant 0 : i32
    %c0_i32_1 = arith.constant 0 : i32
    return %c0_i32, %c0_i32_0 : i32, i32
  }
  func.func @transform_5(%arg0: i32, %arg1: i32) -> (i32, i32) {
    %c0_i32 = arith.constant 0 : i32
    %c0_i32_0 = arith.constant 0 : i32
    %c0_i32_1 = arith.constant 0 : i32
    return %c0_i32, %c0_i32_0 : i32, i32
  }
  func.func @transform_6(%arg0: i32, %arg1: i32) -> (i32, i32) {
    %c0_i32 = arith.constant 0 : i32
    %c0_i32_0 = arith.constant 0 : i32
    %c0_i32_1 = arith.constant 0 : i32
    return %c0_i32, %c0_i32_0 : i32, i32
  }
  func.func @transform_7(%arg0: i32, %arg1: i32) -> (i32, i32, i32) {
    %c0_i32 = arith.constant 0 : i32
    %c0_i32_0 = arith.constant 0 : i32
    %c0_i32_1 = arith.constant 0 : i32
    return %arg0, %c0_i32, %c0_i32_0 : i32, i32, i32
  }
}

</mosaic_0001>

<llo_original>
// kernel: tpu_custom_call.1
$region0: #{tpu_custom_call.1}
  #allocation0 [shape = 'u32[]', space=smem, size = 0x4, offset = 0x4, fixed_abs, tag = 'smem constant byte address 0x4 - core index']
  #allocation1 [shape = 'u32[144,128]{1,0:T(1,128)}', space=vmem, size = 0x12000, scoped, tag = 'internal scratch']
  #allocation2 [shape = 'f32[2,128]{1,0:T(2,128)}', space=vmem, size = 0x400, scoped, tag = 'scratch operand']
  %s0 = inlined_call_operand.vmem [shape: bf16[2,256,27], index: 0, kind: input, shape index: {}]
  %s1 = inlined_call_operand.vmem [shape: bf16[27,128], index: 1, kind: input, shape index: {}]
  %s2 = inlined_call_operand.vmem [shape: f32[1,128], index: 2, kind: input, shape index: {}]
  %s3 = inlined_call_operand.vmem [shape: f32[128,128], index: 3, kind: input, shape index: {}]
  %s4 = inlined_call_operand.vmem [shape: f32[1,128], index: 4, kind: input, shape index: {}]
  %s5 = inlined_call_operand.vmem [shape: f32[128,128], index: 5, kind: input, shape index: {}]
  %s6 = inlined_call_operand.vmem [shape: f32[1,128], index: 6, kind: input, shape index: {}]
  %s7 = inlined_call_operand.hbm [shape: f32[1,2,128], index: 7, kind: output, shape index: {}]
  %s8 = sld [smem:[#allocation0]]
  $region46: #{tpu_custom_call.1} parent=0
    _
  %s10 = ssub.s32 1, %s8
  %s11 = scalar_select 0, %s10, %s8
  $region1: #{tpu_custom_call.1} parent=0
    #allocation3 [shape = 'u8[1024]{0}', space=vmem, size = 0x400, scoped, tag = 'output window, operand 0, single buffered']
    #allocation4 [shape = 's32[1]{0}', space=sflag, size = 0x4, scoped, tag = 'scoped memory for tpu_custom_call.1']
    %12 = vsyncpa [#allocation4], 0
    // Predicated region
    $region2: #{tpu_custom_call.1} parent=1 // pred_check
      _
    $region3: #{tpu_custom_call.1} parent=1 // pred_check_branch
      %14 = sbr.rel (0) target = $region5
    $region4: #{tpu_custom_call.1} parent=1 // pred_region
      _
    $region5: #{tpu_custom_call.1} parent=1 // pred_fallthru
      _
    // Predicated region
    $region6: #{tpu_custom_call.1} parent=1 // pred_check
      _
    $region7: #{tpu_custom_call.1} parent=1 // pred_check_branch
      %16 = sbr.rel (0) target = $region9
    $region8: #{tpu_custom_call.1} parent=1 // pred_region
      _
    $region9: #{tpu_custom_call.1} parent=1 // pred_fallthru
      _
    // Predicated region
    $region10: #{tpu_custom_call.1} parent=1 // pred_check
      _
    $region11: #{tpu_custom_call.1} parent=1 // pred_check_branch
      %18 = sbr.rel (0) target = $region13
    $region12: #{tpu_custom_call.1} parent=1 // pred_region
      _
    $region13: #{tpu_custom_call.1} parent=1 // pred_fallthru
      _
    // Predicated region
    $region14: #{tpu_custom_call.1} parent=1 // pred_check
      _
    $region15: #{tpu_custom_call.1} parent=1 // pred_check_branch
      %20 = sbr.rel (0) target = $region17
    $region16: #{tpu_custom_call.1} parent=1 // pred_region
      _
    $region17: #{tpu_custom_call.1} parent=1 // pred_fallthru
      _
    // Predicated region
    $region18: #{tpu_custom_call.1} parent=1 // pred_check
      _
    $region19: #{tpu_custom_call.1} parent=1 // pred_check_branch
      %22 = sbr.rel (0) target = $region21
    $region20: #{tpu_custom_call.1} parent=1 // pred_region
      _
    $region21: #{tpu_custom_call.1} parent=1 // pred_fallthru
      _
    // Predicated region
    $region22: #{tpu_custom_call.1} parent=1 // pred_check
      _
    $region23: #{tpu_custom_call.1} parent=1 // pred_check_branch
      %24 = sbr.rel (0) target = $region25
    $region24: #{tpu_custom_call.1} parent=1 // pred_region
      _
    $region25: #{tpu_custom_call.1} parent=1 // pred_fallthru
      _
    // Predicated region
    $region26: #{tpu_custom_call.1} parent=1 // pred_check
      _
    $region27: #{tpu_custom_call.1} parent=1 // pred_check_branch
      %26 = sbr.rel (0) target = $region29
    $region28: #{tpu_custom_call.1} parent=1 // pred_region
      _
    $region29: #{tpu_custom_call.1} parent=1 // pred_fallthru
      _
    %p28 = scmp.eq.s32.totalorder 0, 0
    // Predicated region
    $region30: #{tpu_custom_call.1} parent=1 // pred_check
      %p29 = pneg %p28
    $region31: #{tpu_custom_call.1} parent=1 // pred_check_branch
      %31 = sbr.rel (%p29) target = $region33
    $region32: #{tpu_custom_call.1} parent=1 // pred_region
      %32 = vst [vmem:[#allocation2] sm:$0x3] 0.0
    $region33: #{tpu_custom_call.1} parent=1 // pred_fallthru
      _
    %v33 = vld [vmem:[%s0] sm:$0xf]
    %v34 = vld [vmem:[%s0 + $0x4] sm:$0xf]
    %v35 = vld [vmem:[%s0 + $0x8] sm:$0xf]
    %v36 = vld [vmem:[%s0 + $0xc] sm:$0xf]
    %v37 = vld [vmem:[%s0 + $0x10] sm:$0xf]
    %v38 = vld [vmem:[%s0 + $0x14] sm:$0xf]
    %v39 = vld [vmem:[%s0 + $0x18] sm:$0xf]
    %v40 = vld [vmem:[%s0 + $0x1c] sm:$0xf]
    %v41 = vld [vmem:[%s0 + $0x20] sm:$0xf]
    %v42 = vld [vmem:[%s0 + $0x24] sm:$0xf]
    %v43 = vld [vmem:[%s0 + $0x28] sm:$0xf]
    %v44 = vld [vmem:[%s0 + $0x2c] sm:$0xf]
    %v45 = vld [vmem:[%s0 + $0x30] sm:$0xf]
    %v46 = vld [vmem:[%s0 + $0x34] sm:$0xf]
    %v47 = vld [vmem:[%s0 + $0x38] sm:$0xf]
    %v48 = vld [vmem:[%s0 + $0x3c] sm:$0xf]
    %v49 = vld [vmem:[%s0 + $0x40] sm:$0xf]
    %v50 = vld [vmem:[%s0 + $0x44] sm:$0xf]
    %v51 = vld [vmem:[%s0 + $0x48] sm:$0xf]
    %v52 = vld [vmem:[%s0 + $0x4c] sm:$0xf]
    %v53 = vld [vmem:[%s0 + $0x50] sm:$0xf]
    %v54 = vld [vmem:[%s0 + $0x54] sm:$0xf]
    %v55 = vld [vmem:[%s0 + $0x58] sm:$0xf]
    %v56 = vld [vmem:[%s0 + $0x5c] sm:$0xf]
    %v57 = vld [vmem:[%s0 + $0x60] sm:$0xf]
    %v58 = vld [vmem:[%s0 + $0x64] sm:$0xf]
    %v59 = vld [vmem:[%s0 + $0x68] sm:$0xf]
    %v60 = vld [vmem:[%s0 + $0x6c] sm:$0xf]
    %v61 = vld [vmem:[%s0 + $0x70] sm:$0xf]
    %v62 = vld [vmem:[%s0 + $0x74] sm:$0xf]
    %v63 = vld [vmem:[%s0 + $0x78] sm:$0xf]
    %v64 = vld [vmem:[%s0 + $0x7c] sm:$0xf]
    %v65 = vld [vmem:[%s0 + $0x80] sm:$0xf]
    %v66 = vld [vmem:[%s0 + $0x84] sm:$0xf]
    %v67 = vld [vmem:[%s0 + $0x88] sm:$0xf]
    %v68 = vld [vmem:[%s0 + $0x8c] sm:$0xf]
    %v69 = vld [vmem:[%s0 + $0x90] sm:$0xf]
    %v70 = vld [vmem:[%s0 + $0x94] sm:$0xf]
    %v71 = vld [vmem:[%s0 + $0x98] sm:$0xf]
    %v72 = vld [vmem:[%s0 + $0x9c] sm:$0xf]
    %v73 = vld [vmem:[%s0 + $0xa0] sm:$0xf]
    %v74 = vld [vmem:[%s0 + $0xa4] sm:$0xf]
    %v75 = vld [vmem:[%s0 + $0xa8] sm:$0xf]
    %v76 = vld [vmem:[%s0 + $0xac] sm:$0xf]
    %v77 = vld [vmem:[%s0 + $0xb0] sm:$0xf]
    %v78 = vld [vmem:[%s0 + $0xb4] sm:$0xf]
    %v79 = vld [vmem:[%s0 + $0xb8] sm:$0xf]
    %v80 = vld [vmem:[%s0 + $0xbc] sm:$0xf]
    %v81 = vld [vmem:[%s0 + $0xc0] sm:$0xf]
    %v82 = vld [vmem:[%s0 + $0xc4] sm:$0xf]
    %v83 = vld [vmem:[%s0 + $0xc8] sm:$0xf]
    %v84 = vld [vmem:[%s0 + $0xcc] sm:$0xf]
    %v85 = vld [vmem:[%s0 + $0xd0] sm:$0xf]
    %v86 = vld [vmem:[%s0 + $0xd4] sm:$0xf]
    %v87 = vld [vmem:[%s0 + $0xd8] sm:$0xf]
    %v88 = vld [vmem:[%s0 + $0xdc] sm:$0xf]
    %v89 = vld [vmem:[%s0 + $0xe0] sm:$0xf]
    %v90 = vld [vmem:[%s0 + $0xe4] sm:$0xf]
    %v91 = vld [vmem:[%s0 + $0xe8] sm:$0xf]
    %v92 = vld [vmem:[%s0 + $0xec] sm:$0xf]
    %v93 = vld [vmem:[%s0 + $0xf0] sm:$0xf]
    %v94 = vld [vmem:[%s0 + $0xf4] sm:$0xf]
    %v95 = vld [vmem:[%s0 + $0xf8] sm:$0xf]
    %v96 = vld [vmem:[%s0 + $0xfc] sm:$0xf]
    %v97 = vld [vmem:[%s1] sm:$0xf]
    %v98 = vld [vmem:[%s1 + $0x4] sm:$0xf]
    %v99 = vld [vmem:[%s1 + $0x8] sm:$0xf]
    %v100 = vld [vmem:[%s1 + $0xc] sm:$0x3]
    %v101 = vld [vmem:[%s2] sm:$0x1]
    %v103 = vlaneseq
    %v104 = vshrl.u32 %v103, 7
    %v105 = vsub.s32 0, %v104
    %v106 = vrot.slane %v101, %v105
    %v172 = vunpack.c.l.b16 %v33
    %v173 = vunpack.c.l.b16 %v34
    %v174 = vunpack.c.l.b16 %v35
    %v175 = vunpack.c.l.b16 %v36
    %v176 = vunpack.c.l.b16 %v37
    %v177 = vunpack.c.l.b16 %v38
    %v178 = vunpack.c.l.b16 %v39
    %v179 = vunpack.c.l.b16 %v40
    %v180 = vunpack.c.l.b16 %v41
    %v181 = vunpack.c.l.b16 %v42
    %v182 = vunpack.c.l.b16 %v43
    %v183 = vunpack.c.l.b16 %v44
    %v184 = vunpack.c.l.b16 %v45
    %v185 = vunpack.c.l.b16 %v46
    %v186 = vunpack.c.l.b16 %v47
    %v187 = vunpack.c.l.b16 %v48
    %v188 = vunpack.c.l.b16 %v49
    %v189 = vunpack.c.l.b16 %v50
    %v190 = vunpack.c.l.b16 %v51
    %v191 = vunpack.c.l.b16 %v52
    %v192 = vunpack.c.l.b16 %v53
    %v193 = vunpack.c.l.b16 %v54
    %v194 = vunpack.c.l.b16 %v55
    %v195 = vunpack.c.l.b16 %v56
    %v196 = vunpack.c.l.b16 %v57
    %v197 = vunpack.c.l.b16 %v58
    %v198 = vunpack.c.l.b16 %v59
    %v199 = vunpack.c.l.b16 %v60
    %v200 = vunpack.c.l.b16 %v61
    %v201 = vunpack.c.l.b16 %v62
    %v202 = vunpack.c.l.b16 %v63
    %v203 = vunpack.c.l.b16 %v64
    %v204 = vunpack.c.l.b16 %v65
    %v205 = vunpack.c.l.b16 %v66
    %v206 = vunpack.c.l.b16 %v67
    %v207 = vunpack.c.l.b16 %v68
    %v208 = vunpack.c.l.b16 %v69
    %v209 = vunpack.c.l.b16 %v70
    %v210 = vunpack.c.l.b16 %v71
    %v211 = vunpack.c.l.b16 %v72
    %v212 = vunpack.c.l.b16 %v73
    %v213 = vunpack.c.l.b16 %v74
    %v214 = vunpack.c.l.b16 %v75
    %v215 = vunpack.c.l.b16 %v76
    %v216 = vunpack.c.l.b16 %v77
    %v217 = vunpack.c.l.b16 %v78
    %v218 = vunpack.c.l.b16 %v79
    %v219 = vunpack.c.l.b16 %v80
    %v220 = vunpack.c.l.b16 %v81
    %v221 = vunpack.c.l.b16 %v82
    %v222 = vunpack.c.l.b16 %v83
    %v223 = vunpack.c.l.b16 %v84
    %v224 = vunpack.c.l.b16 %v85
    %v225 = vunpack.c.l.b16 %v86
    %v226 = vunpack.c.l.b16 %v87
    %v227 = vunpack.c.l.b16 %v88
    %v228 = vunpack.c.l.b16 %v89
    %v229 = vunpack.c.l.b16 %v90
    %v230 = vunpack.c.l.b16 %v91
    %v231 = vunpack.c.l.b16 %v92
    %v232 = vunpack.c.l.b16 %v93
    %v233 = vunpack.c.l.b16 %v94
    %v234 = vunpack.c.l.b16 %v95
    %v235 = vunpack.c.l.b16 %v96
    %v236 = vpack.c.b16 %v173, %v172
    %v237 = vpack.c.b16 %v175, %v174
    %v238 = vpack.c.b16 %v177, %v176
    %v239 = vpack.c.b16 %v179, %v178
    %v240 = vpack.c.b16 %v181, %v180
    %v241 = vpack.c.b16 %v183, %v182
    %v242 = vpack.c.b16 %v185, %v184
    %v243 = vpack.c.b16 %v187, %v186
    %v244 = vpack.c.b16 %v189, %v188
    %v245 = vpack.c.b16 %v191, %v190
    %v246 = vpack.c.b16 %v193, %v192
    %v247 = vpack.c.b16 %v195, %v194
    %v248 = vpack.c.b16 %v197, %v196
    %v249 = vpack.c.b16 %v199, %v198
    %v250 = vpack.c.b16 %v201, %v200
    %v251 = vpack.c.b16 %v203, %v202
    %v252 = vpack.c.b16 %v205, %v204
    %v253 = vpack.c.b16 %v207, %v206
    %v254 = vpack.c.b16 %v209, %v208
    %v255 = vpack.c.b16 %v211, %v210
    %v256 = vpack.c.b16 %v213, %v212
    %v257 = vpack.c.b16 %v215, %v214
    %v258 = vpack.c.b16 %v217, %v216
    %v259 = vpack.c.b16 %v219, %v218
    %v260 = vpack.c.b16 %v221, %v220
    %v261 = vpack.c.b16 %v223, %v222
    %v262 = vpack.c.b16 %v225, %v224
    %v263 = vpack.c.b16 %v227, %v226
    %v264 = vpack.c.b16 %v229, %v228
    %v265 = vpack.c.b16 %v231, %v230
    %v266 = vpack.c.b16 %v233, %v232
    %v267 = vpack.c.b16 %v235, %v234
    %v272 = vunpack.c.l.b16 %v97
    %v273 = vunpack.c.l.b16 %v98
    %v274 = vunpack.c.l.b16 %v99
    %v275 = vunpack.c.l.b16 %v100
    %v276 = vpack.c.b16 %v273, %v272
    %v277 = vpack.c.b16 %v275, %v274
    %vm279 = vcmask 220160
    %v281 = vsel %vm279, %v236, 0
    %v284 = vsel %vm279, %v237, 0
    %v287 = vsel %vm279, %v238, 0
    %v290 = vsel %vm279, %v239, 0
    %v293 = vsel %vm279, %v240, 0
    %v296 = vsel %vm279, %v241, 0
    %v299 = vsel %vm279, %v242, 0
    %v302 = vsel %vm279, %v243, 0
    %v305 = vsel %vm279, %v244, 0
    %v308 = vsel %vm279, %v245, 0
    %v311 = vsel %vm279, %v246, 0
    %v314 = vsel %vm279, %v247, 0
    %v317 = vsel %vm279, %v248, 0
    %v320 = vsel %vm279, %v249, 0
    %v323 = vsel %vm279, %v250, 0
    %v326 = vsel %vm279, %v251, 0
    %v329 = vsel %vm279, %v252, 0
    %v332 = vsel %vm279, %v253, 0
    %v335 = vsel %vm279, %v254, 0
    %v338 = vsel %vm279, %v255, 0
    %v341 = vsel %vm279, %v256, 0
    %v344 = vsel %vm279, %v257, 0
    %v347 = vsel %vm279, %v258, 0
    %v350 = vsel %vm279, %v259, 0
    %v353 = vsel %vm279, %v260, 0
    %v356 = vsel %vm279, %v261, 0
    %v359 = vsel %vm279, %v262, 0
    %v362 = vsel %vm279, %v263, 0
    %v365 = vsel %vm279, %v264, 0
    %v368 = vsel %vm279, %v265, 0
    %v371 = vsel %vm279, %v266, 0
    %v374 = vsel %vm279, %v267, 0
    %vm376 = vcmask 1044480
    %vm377 = vcmask 1045504
    %v378 = vsel %vm376, 4294967295, 65535
    %v379 = vsel %vm377, %v378, 0
    %v381 = vand.u32 %v277, %v379
    %383 = vmatprep.subr.bf16.mxu0 0
    %384 = vmatpush1.bf16.msra.mxu0 %v276
    %385 = vmatprep.subr.bf16.mxu0 0
    %386 = vmatpush1.bf16.msra.mxu0 %v381
    %387 = vmatprep.subr.bf16.mxu0 0
    %388 = vmatpush1.bf16.msra.mxu0 0
    %389 = vmatprep.subr.bf16.mxu0 0
    %390 = vmatpush1.bf16.msra.mxu0 0
    %391 = vmatprep.subr.bf16.mxu0 0
    %392 = vmatpush1.bf16.msra.mxu0 0
    %393 = vmatprep.subr.bf16.mxu0 0
    %394 = vmatpush1.bf16.msra.mxu0 0
    %395 = vmatprep.subr.bf16.mxu0 0
    %396 = vmatpush1.bf16.msra.mxu0 0
    %397 = vmatprep.subr.bf16.mxu0 0
    %398 = vmatpush1.bf16.msra.mxu0 0
    %399 = vmatprep.subr.bf16.mxu0 0
    %400 = vmatpush1.bf16.msra.mxu0 0
    %401 = vmatprep.subr.bf16.mxu0 0
    %402 = vmatpush1.bf16.msra.mxu0 0
    %403 = vmatprep.subr.bf16.mxu0 0
    %404 = vmatpush1.bf16.msra.mxu0 0
    %405 = vmatprep.subr.bf16.mxu0 0
    %406 = vmatpush1.bf16.msra.mxu0 0
    %407 = vmatprep.subr.bf16.mxu0 0
    %408 = vmatpush1.bf16.msra.mxu0 0
    %409 = vmatprep.subr.bf16.mxu0 0
    %410 = vmatpush1.bf16.msra.mxu0 0
    %411 = vmatprep.subr.bf16.mxu0 0
    %412 = vmatpush1.bf16.msra.mxu0 0
    %413 = vmatprep.subr.bf16.mxu0 0
    %414 = vmatpush1.bf16.msra.mxu0 0
    %415 = vmatprep.mubr.bf16.mxu0 0
    %416 = vmatmul.mubr.bf16.gmra.mrb[0].mxu0 %v281
    %v417 = vpop.f32.mrb[0].mxu0
    %v418 = vadd.f32 %v106, %v417
    %v419 = vpop.f32.mrb[0].mxu0
    %v420 = vpop.f32.mrb[0].mxu0
    %v421 = vadd.f32 %v106, %v420
    %v422 = vpop.f32.mrb[0].mxu0
    %423 = vmatprep.mubr.bf16.mxu0 0
    %424 = vmatmul.mubr.bf16.gmra.mrb[0].mxu0 %v284
    %v425 = vpop.f32.mrb[0].mxu0
    %v426 = vadd.f32 %v106, %v425
    %v427 = vpop.f32.mrb[0].mxu0
    %v428 = vpop.f32.mrb[0].mxu0
    %v429 = vadd.f32 %v106, %v428
    %v430 = vpop.f32.mrb[0].mxu0
    %431 = vmatprep.mubr.bf16.mxu0 0
    %432 = vmatmul.mubr.bf16.gmra.mrb[0].mxu0 %v287
    %v433 = vpop.f32.mrb[0].mxu0
    %v434 = vadd.f32 %v106, %v433
    %v435 = vpop.f32.mrb[0].mxu0
    %v436 = vpop.f32.mrb[0].mxu0
    %v437 = vadd.f32 %v106, %v436
    %v438 = vpop.f32.mrb[0].mxu0
    %439 = vmatprep.mubr.bf16.mxu0 0
    %440 = vmatmul.mubr.bf16.gmra.mrb[0].mxu0 %v290
    %v441 = vpop.f32.mrb[0].mxu0
    %v442 = vadd.f32 %v106, %v441
    %v443 = vpop.f32.mrb[0].mxu0
    %v444 = vpop.f32.mrb[0].mxu0
    %v445 = vadd.f32 %v106, %v444
    %v446 = vpop.f32.mrb[0].mxu0
    %447 = vmatprep.mubr.bf16.mxu0 0
    %448 = vmatmul.mubr.bf16.gmra.mrb[0].mxu0 %v293
    %v449 = vpop.f32.mrb[0].mxu0
    %v450 = vadd.f32 %v106, %v449
    %v451 = vpop.f32.mrb[0].mxu0
    %v452 = vpop.f32.mrb[0].mxu0
    %v453 = vadd.f32 %v106, %v452
    %v454 = vpop.f32.mrb[0].mxu0
    %455 = vmatprep.mubr.bf16.mxu0 0
    %456 = vmatmul.mubr.bf16.gmra.mrb[0].mxu0 %v296
    %v457 = vpop.f32.mrb[0].mxu0
    %v458 = vadd.f32 %v106, %v457
    %v459 = vpop.f32.mrb[0].mxu0
    %v460 = vpop.f32.mrb[0].mxu0
    %v461 = vadd.f32 %v106, %v460
    %v462 = vpop.f32.mrb[0].mxu0
    %463 = vmatprep.mubr.bf16.mxu0 0
    %464 = vmatmul.mubr.bf16.gmra.mrb[0].mxu0 %v299
    %v465 = vpop.f32.mrb[0].mxu0
    %v466 = vadd.f32 %v106, %v465
    %v467 = vpop.f32.mrb[0].mxu0
    %v468 = vpop.f32.mrb[0].mxu0
    %v469 = vadd.f32 %v106, %v468
    %v470 = vpop.f32.mrb[0].mxu0
    %471 = vmatprep.mubr.bf16.mxu0 0
    %472 = vmatmul.mubr.bf16.gmra.mrb[0].mxu0 %v302
    %v473 = vpop.f32.mrb[0].mxu0
    %v474 = vadd.f32 %v106, %v473
    %v475 = vpop.f32.mrb[0].mxu0
    %v476 = vpop.f32.mrb[0].mxu0
    %v477 = vadd.f32 %v106, %v476
    %v478 = vpop.f32.mrb[0].mxu0
    %479 = vmatprep.mubr.bf16.mxu0 0
    %480 = vmatmul.mubr.bf16.gmra.mrb[0].mxu0 %v305
    %v481 = vpop.f32.mrb[0].mxu0
    %v482 = vadd.f32 %v106, %v481
    %v483 = vpop.f32.mrb[0].mxu0
    %v484 = vpop.f32.mrb[0].mxu0
    %v485 = vadd.f32 %v106, %v484
    %v486 = vpop.f32.mrb[0].mxu0
    %487 = vmatprep.mubr.bf16.mxu0 0
    %488 = vmatmul.mubr.bf16.gmra.mrb[0].mxu0 %v308
    %v489 = vpop.f32.mrb[0].mxu0
    %v490 = vadd.f32 %v106, %v489
    %v491 = vpop.f32.mrb[0].mxu0
    %v492 = vpop.f32.mrb[0].mxu0
    %v493 = vadd.f32 %v106, %v492
    %v494 = vpop.f32.mrb[0].mxu0
    %495 = vmatprep.mubr.bf16.mxu0 0
    %496 = vmatmul.mubr.bf16.gmra.mrb[0].mxu0 %v311
    %v497 = vpop.f32.mrb[0].mxu0
    %v498 = vadd.f32 %v106, %v497
    %v499 = vpop.f32.mrb[0].mxu0
    %v500 = vpop.f32.mrb[0].mxu0
    %v501 = vadd.f32 %v106, %v500
    %v502 = vpop.f32.mrb[0].mxu0
    %503 = vmatprep.mubr.bf16.mxu0 0
    %504 = vmatmul.mubr.bf16.gmra.mrb[0].mxu0 %v314
    %v505 = vpop.f32.mrb[0].mxu0
    %v506 = vadd.f32 %v106, %v505
    %v507 = vpop.f32.mrb[0].mxu0
    %v508 = vpop.f32.mrb[0].mxu0
    %v509 = vadd.f32 %v106, %v508
    %v510 = vpop.f32.mrb[0].mxu0
    %511 = vmatprep.mubr.bf16.mxu0 0
    %512 = vmatmul.mubr.bf16.gmra.mrb[0].mxu0 %v317
    %v513 = vpop.f32.mrb[0].mxu0
    %v514 = vadd.f32 %v106, %v513
    %v515 = vpop.f32.mrb[0].mxu0
    %v516 = vpop.f32.mrb[0].mxu0
    %v517 = vadd.f32 %v106, %v516
    %v518 = vpop.f32.mrb[0].mxu0
    %519 = vmatprep.mubr.bf16.mxu0 0
    %520 = vmatmul.mubr.bf16.gmra.mrb[0].mxu0 %v320
    %v521 = vpop.f32.mrb[0].mxu0
    %v522 = vadd.f32 %v106, %v521
    %v523 = vpop.f32.mrb[0].mxu0
    %v524 = vpop.f32.mrb[0].mxu0
    %v525 = vadd.f32 %v106, %v524
    %v526 = vpop.f32.mrb[0].mxu0
    %527 = vmatprep.mubr.bf16.mxu0 0
    %528 = vmatmul.mubr.bf16.gmra.mrb[0].mxu0 %v323
    %v529 = vpop.f32.mrb[0].mxu0
    %v530 = vadd.f32 %v106, %v529
    %v531 = vpop.f32.mrb[0].mxu0
    %v532 = vpop.f32.mrb[0].mxu0
    %v533 = vadd.f32 %v106, %v532
    %v534 = vpop.f32.mrb[0].mxu0
    %535 = vmatprep.mubr.bf16.mxu0 0
    %536 = vmatmul.mubr.bf16.gmra.mrb[0].mxu0 %v326
    %v537 = vpop.f32.mrb[0].mxu0
    %v538 = vadd.f32 %v106, %v537
    %v539 = vpop.f32.mrb[0].mxu0
    %v540 = vpop.f32.mrb[0].mxu0
    %v541 = vadd.f32 %v106, %v540
    %v542 = vpop.f32.mrb[0].mxu0
    %543 = vmatprep.mubr.bf16.mxu0 0
    %544 = vmatmul.mubr.bf16.gmra.mrb[0].mxu0 %v329
    %v545 = vpop.f32.mrb[0].mxu0
    %v546 = vadd.f32 %v106, %v545
    %v547 = vpop.f32.mrb[0].mxu0
    %v548 = vpop.f32.mrb[0].mxu0
    %v549 = vadd.f32 %v106, %v548
    %v550 = vpop.f32.mrb[0].mxu0
    %551 = vmatprep.mubr.bf16.mxu0 0
    %552 = vmatmul.mubr.bf16.gmra.mrb[0].mxu0 %v332
    %v553 = vpop.f32.mrb[0].mxu0
    %v554 = vadd.f32 %v106, %v553
    %v555 = vpop.f32.mrb[0].mxu0
    %v556 = vpop.f32.mrb[0].mxu0
    %v557 = vadd.f32 %v106, %v556
    %v558 = vpop.f32.mrb[0].mxu0
    %559 = vmatprep.mubr.bf16.mxu0 0
    %560 = vmatmul.mubr.bf16.gmra.mrb[0].mxu0 %v335
    %v561 = vpop.f32.mrb[0].mxu0
    %v562 = vadd.f32 %v106, %v561
    %v563 = vpop.f32.mrb[0].mxu0
    %v564 = vpop.f32.mrb[0].mxu0
    %v565 = vadd.f32 %v106, %v564
    %v566 = vpop.f32.mrb[0].mxu0
    %567 = vmatprep.mubr.bf16.mxu0 0
    %568 = vmatmul.mubr.bf16.gmra.mrb[0].mxu0 %v338
    %v569 = vpop.f32.mrb[0].mxu0
    %v570 = vadd.f32 %v106, %v569
    %v571 = vpop.f32.mrb[0].mxu0
    %v572 = vpop.f32.mrb[0].mxu0
    %v573 = vadd.f32 %v106, %v572
    %v574 = vpop.f32.mrb[0].mxu0
    %575 = vmatprep.mubr.bf16.mxu0 0
    %576 = vmatmul.mubr.bf16.gmra.mrb[0].mxu0 %v341
    %v577 = vpop.f32.mrb[0].mxu0
    %v578 = vadd.f32 %v106, %v577
    %v579 = vpop.f32.mrb[0].mxu0
    %v580 = vpop.f32.mrb[0].mxu0
    %v581 = vadd.f32 %v106, %v580
    %v582 = vpop.f32.mrb[0].mxu0
    %583 = vmatprep.mubr.bf16.mxu0 0
    %584 = vmatmul.mubr.bf16.gmra.mrb[0].mxu0 %v344
    %v585 = vpop.f32.mrb[0].mxu0
    %v586 = vadd.f32 %v106, %v585
    %v587 = vpop.f32.mrb[0].mxu0
    %v588 = vpop.f32.mrb[0].mxu0
    %v589 = vadd.f32 %v106, %v588
    %v590 = vpop.f32.mrb[0].mxu0
    %591 = vmatprep.mubr.bf16.mxu0 0
    %592 = vmatmul.mubr.bf16.gmra.mrb[0].mxu0 %v347
    %v593 = vpop.f32.mrb[0].mxu0
    %v594 = vadd.f32 %v106, %v593
    %v595 = vpop.f32.mrb[0].mxu0
    %v596 = vpop.f32.mrb[0].mxu0
    %v597 = vadd.f32 %v106, %v596
    %v598 = vpop.f32.mrb[0].mxu0
    %599 = vmatprep.mubr.bf16.mxu0 0
    %600 = vmatmul.mubr.bf16.gmra.mrb[0].mxu0 %v350
    %v601 = vpop.f32.mrb[0].mxu0
    %v602 = vadd.f32 %v106, %v601
    %v603 = vpop.f32.mrb[0].mxu0
    %v604 = vpop.f32.mrb[0].mxu0
    %v605 = vadd.f32 %v106, %v604
    %v606 = vpop.f32.mrb[0].mxu0
    %607 = vmatprep.mubr.bf16.mxu0 0
    %608 = vmatmul.mubr.bf16.gmra.mrb[0].mxu0 %v353
    %v609 = vpop.f32.mrb[0].mxu0
    %v610 = vadd.f32 %v106, %v609
    %v611 = vpop.f32.mrb[0].mxu0
    %v612 = vpop.f32.mrb[0].mxu0
    %v613 = vadd.f32 %v106, %v612
    %v614 = vpop.f32.mrb[0].mxu0
    %615 = vmatprep.mubr.bf16.mxu0 0
    %616 = vmatmul.mubr.bf16.gmra.mrb[0].mxu0 %v356
    %v617 = vpop.f32.mrb[0].mxu0
    %v618 = vadd.f32 %v106, %v617
    %v619 = vpop.f32.mrb[0].mxu0
    %v620 = vpop.f32.mrb[0].mxu0
    %v621 = vadd.f32 %v106, %v620
    %v622 = vpop.f32.mrb[0].mxu0
    %623 = vmatprep.mubr.bf16.mxu0 0
    %624 = vmatmul.mubr.bf16.gmra.mrb[0].mxu0 %v359
    %v625 = vpop.f32.mrb[0].mxu0
    %v626 = vadd.f32 %v106, %v625
    %v627 = vpop.f32.mrb[0].mxu0
    %v628 = vpop.f32.mrb[0].mxu0
    %v629 = vadd.f32 %v106, %v628
    %v630 = vpop.f32.mrb[0].mxu0
    %631 = vmatprep.mubr.bf16.mxu0 0
    %632 = vmatmul.mubr.bf16.gmra.mrb[0].mxu0 %v362
    %v633 = vpop.f32.mrb[0].mxu0
    %v634 = vadd.f32 %v106, %v633
    %v635 = vpop.f32.mrb[0].mxu0
    %v636 = vpop.f32.mrb[0].mxu0
    %v637 = vadd.f32 %v106, %v636
    %v638 = vpop.f32.mrb[0].mxu0
    %639 = vmatprep.mubr.bf16.mxu0 0
    %640 = vmatmul.mubr.bf16.gmra.mrb[0].mxu0 %v365
    %v641 = vpop.f32.mrb[0].mxu0
    %v642 = vadd.f32 %v106, %v641
    %v643 = vpop.f32.mrb[0].mxu0
    %v644 = vpop.f32.mrb[0].mxu0
    %v645 = vadd.f32 %v106, %v644
    %v646 = vpop.f32.mrb[0].mxu0
    %647 = vmatprep.mubr.bf16.mxu0 0
    %648 = vmatmul.mubr.bf16.gmra.mrb[0].mxu0 %v368
    %v649 = vpop.f32.mrb[0].mxu0
    %v650 = vadd.f32 %v106, %v649
    %v651 = vpop.f32.mrb[0].mxu0
    %v652 = vpop.f32.mrb[0].mxu0
    %v653 = vadd.f32 %v106, %v652
    %v654 = vpop.f32.mrb[0].mxu0
    %655 = vmatprep.mubr.bf16.mxu0 0
    %656 = vmatmul.mubr.bf16.gmra.mrb[0].mxu0 %v371
    %v657 = vpop.f32.mrb[0].mxu0
    %v658 = vadd.f32 %v106, %v657
    %v659 = vpop.f32.mrb[0].mxu0
    %v660 = vpop.f32.mrb[0].mxu0
    %v661 = vadd.f32 %v106, %v660
    %v662 = vpop.f32.mrb[0].mxu0
    %663 = vmatprep.mubr.bf16.mxu0 0
    %664 = vmatmul.mubr.bf16.gmra.mrb[0].mxu0 %v374
    %v665 = vpop.f32.mrb[0].mxu0
    %v666 = vadd.f32 %v106, %v665
    %v667 = vpop.f32.mrb[0].mxu0
    %v668 = vpop.f32.mrb[0].mxu0
    %v669 = vadd.f32 %v106, %v668
    %v670 = vpop.f32.mrb[0].mxu0
    %671 = vdwg.mxu0
    %v672 = vmax.f32 %v418, 0.0
    %v673 = vmax.f32 %v421, 0.0
    %v674 = vmax.f32 %v426, 0.0
    %v675 = vmax.f32 %v429, 0.0
    %v676 = vmax.f32 %v434, 0.0
    %v677 = vmax.f32 %v437, 0.0
    %v678 = vmax.f32 %v442, 0.0
    %v679 = vmax.f32 %v445, 0.0
    %v680 = vmax.f32 %v450, 0.0
    %v681 = vmax.f32 %v453, 0.0
    %v682 = vmax.f32 %v458, 0.0
    %v683 = vmax.f32 %v461, 0.0
    %v684 = vmax.f32 %v466, 0.0
    %v685 = vmax.f32 %v469, 0.0
    %v686 = vmax.f32 %v474, 0.0
    %v687 = vmax.f32 %v477, 0.0
    %v688 = vmax.f32 %v482, 0.0
    %v689 = vmax.f32 %v485, 0.0
    %v690 = vmax.f32 %v490, 0.0
    %v691 = vmax.f32 %v493, 0.0
    %v692 = vmax.f32 %v498, 0.0
    %v693 = vmax.f32 %v501, 0.0
    %v694 = vmax.f32 %v506, 0.0
    %v695 = vmax.f32 %v509, 0.0
    %v696 = vmax.f32 %v514, 0.0
    %v697 = vmax.f32 %v517, 0.0
    %v698 = vmax.f32 %v522, 0.0
    %v699 = vmax.f32 %v525, 0.0
    %v700 = vmax.f32 %v530, 0.0
    %v701 = vmax.f32 %v533, 0.0
    %v702 = vmax.f32 %v538, 0.0
    %v703 = vmax.f32 %v541, 0.0
    %v704 = vmax.f32 %v546, 0.0
    %v705 = vmax.f32 %v549, 0.0
    %v706 = vmax.f32 %v554, 0.0
    %v707 = vmax.f32 %v557, 0.0
    %v708 = vmax.f32 %v562, 0.0
    %v709 = vmax.f32 %v565, 0.0
    %v710 = vmax.f32 %v570, 0.0
    %v711 = vmax.f32 %v573, 0.0
    %v712 = vmax.f32 %v578, 0.0
    %v713 = vmax.f32 %v581, 0.0
    %v714 = vmax.f32 %v586, 0.0
    %v715 = vmax.f32 %v589, 0.0
    %v716 = vmax.f32 %v594, 0.0
    %v717 = vmax.f32 %v597, 0.0
    %v718 = vmax.f32 %v602, 0.0
    %v719 = vmax.f32 %v605, 0.0
    %v720 = vmax.f32 %v610, 0.0
    %v721 = vmax.f32 %v613, 0.0
    %v722 = vmax.f32 %v618, 0.0
    %v723 = vmax.f32 %v621, 0.0
    %v724 = vmax.f32 %v626, 0.0
    %v725 = vmax.f32 %v629, 0.0
    %v726 = vmax.f32 %v634, 0.0
    %v727 = vmax.f32 %v637, 0.0
    %v728 = vmax.f32 %v642, 0.0
    %v729 = vmax.f32 %v645, 0.0
    %v730 = vmax.f32 %v650, 0.0
    %v731 = vmax.f32 %v653, 0.0
    %v732 = vmax.f32 %v658, 0.0
    %v733 = vmax.f32 %v661, 0.0
    %v734 = vmax.f32 %v666, 0.0
    %v735 = vmax.f32 %v669, 0.0
    %v736 = vadd.f32 %v672, %v673
    %v737 = vadd.f32 %v736, %v674
    %v738 = vadd.f32 %v737, %v675
    %v739 = vadd.f32 %v738, %v676
    %v740 = vadd.f32 %v739, %v677
    %v741 = vadd.f32 %v740, %v678
    %v742 = vadd.f32 %v741, %v679
    %v743 = vadd.f32 %v742, %v680
    %v744 = vadd.f32 %v743, %v681
    %v745 = vadd.f32 %v744, %v682
    %v746 = vadd.f32 %v745, %v683
    %v747 = vadd.f32 %v746, %v684
    %v748 = vadd.f32 %v747, %v685
    %v749 = vadd.f32 %v748, %v686
    %v750 = vadd.f32 %v749, %v687
    %v751 = vadd.f32 %v750, %v688
    %v752 = vadd.f32 %v751, %v689
    %v753 = vadd.f32 %v752, %v690
    %v754 = vadd.f32 %v753, %v691
    %v755 = vadd.f32 %v754, %v692
    %v756 = vadd.f32 %v755, %v693
    %v757 = vadd.f32 %v756, %v694
    %v758 = vadd.f32 %v757, %v695
    %v759 = vadd.f32 %v758, %v696
    %v760 = vadd.f32 %v759, %v697
    %v761 = vadd.f32 %v760, %v698
    %v762 = vadd.f32 %v761, %v699
    %v763 = vadd.f32 %v762, %v700
    %v764 = vadd.f32 %v763, %v701
    %v765 = vadd.f32 %v764, %v702
    %v766 = vadd.f32 %v765, %v703
    %v767 = vrot.slane %v766, 4
    %v768 = vadd.f32 %v766, %v767
    %v769 = vrot.slane %v768, 2
    %v770 = vadd.f32 %v768, %v769
    %v771 = vrot.slane %v770, 1
    %v772 = vadd.f32 %v770, %v771
    %v773 = vadd.f32 %v704, %v705
    %v774 = vadd.f32 %v773, %v706
    %v775 = vadd.f32 %v774, %v707
    %v776 = vadd.f32 %v775, %v708
    %v777 = vadd.f32 %v776, %v709
    %v778 = vadd.f32 %v777, %v710
    %v779 = vadd.f32 %v778, %v711
    %v780 = vadd.f32 %v779, %v712
    %v781 = vadd.f32 %v780, %v713
    %v782 = vadd.f32 %v781, %v714
    %v783 = vadd.f32 %v782, %v715
    %v784 = vadd.f32 %v783, %v716
    %v785 = vadd.f32 %v784, %v717
    %v786 = vadd.f32 %v785, %v718
    %v787 = vadd.f32 %v786, %v719
    %v788 = vadd.f32 %v787, %v720
    %v789 = vadd.f32 %v788, %v721
    %v790 = vadd.f32 %v789, %v722
    %v791 = vadd.f32 %v790, %v723
    %v792 = vadd.f32 %v791, %v724
    %v793 = vadd.f32 %v792, %v725
    %v794 = vadd.f32 %v793, %v726
    %v795 = vadd.f32 %v794, %v727
    %v796 = vadd.f32 %v795, %v728
    %v797 = vadd.f32 %v796, %v729
    %v798 = vadd.f32 %v797, %v730
    %v799 = vadd.f32 %v798, %v731
    %v800 = vadd.f32 %v799, %v732
    %v801 = vadd.f32 %v800, %v733
    %v802 = vadd.f32 %v801, %v734
    %v803 = vadd.f32 %v802, %v735
    %v804 = vrot.slane %v803, 4
    %v805 = vadd.f32 %v803, %v804
    %v806 = vrot.slane %v805, 2
    %v807 = vadd.f32 %v805, %v806
    %v808 = vrot.slane %v807, 1
    %v809 = vadd.f32 %v807, %v808
    %v810 = vld [vmem:[#allocation2] sm:$0x3]
    %vm811 = vcmask 1040384
    %v812 = vsel %vm811, %v772, %v809
    %v813 = vadd.f32 %v810, %v812
    %814 = vst [vmem:[#allocation2] sm:$0x3] %v813
    // Predicated region
    $region34: #{tpu_custom_call.1} parent=1 // pred_check
      %p815 = pneg %p28
    $region35: #{tpu_custom_call.1} parent=1 // pred_check_branch
      %817 = sbr.rel (%p815) target = $region37
    $region36: #{tpu_custom_call.1} parent=1 // pred_region
      %v818 = vld [vmem:[#allocation2] sm:$0x3]
      %v819 = vmul.f32 %v818, 0.00390625
      %v820 = vld [vmem:[%s3] sm:$0xff]
      %v821 = vld [vmem:[%s3 + $0x8] sm:$0xff]
      %v822 = vld [vmem:[%s3 + $0x10] sm:$0xff]
      %v823 = vld [vmem:[%s3 + $0x18] sm:$0xff]
      %v824 = vld [vmem:[%s3 + $0x20] sm:$0xff]
      %v825 = vld [vmem:[%s3 + $0x28] sm:$0xff]
      %v826 = vld [vmem:[%s3 + $0x30] sm:$0xff]
      %v827 = vld [vmem:[%s3 + $0x38] sm:$0xff]
      %v828 = vld [vmem:[%s3 + $0x40] sm:$0xff]
      %v829 = vld [vmem:[%s3 + $0x48] sm:$0xff]
      %v830 = vld [vmem:[%s3 + $0x50] sm:$0xff]
      %v831 = vld [vmem:[%s3 + $0x58] sm:$0xff]
      %v832 = vld [vmem:[%s3 + $0x60] sm:$0xff]
      %v833 = vld [vmem:[%s3 + $0x68] sm:$0xff]
      %v834 = vld [vmem:[%s3 + $0x70] sm:$0xff]
      %v835 = vld [vmem:[%s3 + $0x78] sm:$0xff]
      %v836 = vld [vmem:[%s4] sm:$0x1]
      %v838 = vlaneseq
      %v839 = vshrl.u32 %v838, 7
      %v840 = vsub.s32 0, %v839
      %v841 = vrot.slane %v836, %v840
      %843 = vmatprep.subr.mxu0 0.0
      %844 = vmatpush1.msra.mxu0 %v820
      %845 = vmatprep.subr.mxu0 0.0
      %846 = vmatpush1.msra.mxu0 %v821
      %847 = vmatprep.subr.mxu0 0.0
      %848 = vmatpush1.msra.mxu0 %v822
      %849 = vmatprep.subr.mxu0 0.0
      %850 = vmatpush1.msra.mxu0 %v823
      %851 = vmatprep.subr.mxu0 0.0
      %852 = vmatpush1.msra.mxu0 %v824
      %853 = vmatprep.subr.mxu0 0.0
      %854 = vmatpush1.msra.mxu0 %v825
      %855 = vmatprep.subr.mxu0 0.0
      %856 = vmatpush1.msra.mxu0 %v826
      %857 = vmatprep.subr.mxu0 0.0
      %858 = vmatpush1.msra.mxu0 %v827
      %859 = vmatprep.subr.mxu0 0.0
      %860 = vmatpush1.msra.mxu0 %v828
      %861 = vmatprep.subr.mxu0 0.0
      %862 = vmatpush1.msra.mxu0 %v829
      %863 = vmatprep.subr.mxu0 0.0
      %864 = vmatpush1.msra.mxu0 %v830
      %865 = vmatprep.subr.mxu0 0.0
      %866 = vmatpush1.msra.mxu0 %v831
      %867 = vmatprep.subr.mxu0 0.0
      %868 = vmatpush1.msra.mxu0 %v832
      %869 = vmatprep.subr.mxu0 0.0
      %870 = vmatpush1.msra.mxu0 %v833
      %871 = vmatprep.subr.mxu0 0.0
      %872 = vmatpush1.msra.mxu0 %v834
      %873 = vmatprep.subr.mxu0 0.0
      %874 = vmatpush1.msra.mxu0 %v835
      %875 = vmatprep.subr.mxu0 0.0
      %876 = vmatpush1.msra.mxu0 0.0
      %877 = vmatprep.subr.mxu0 0.0
      %878 = vmatpush1.msra.mxu0 0.0
      %879 = vmatprep.subr.mxu0 0.0
      %880 = vmatpush1.msra.mxu0 0.0
      %881 = vmatprep.subr.mxu0 0.0
      %882 = vmatpush1.msra.mxu0 0.0
      %883 = vmatprep.subr.mxu0 0.0
      %884 = vmatpush1.msra.mxu0 0.0
      %885 = vmatprep.subr.mxu0 0.0
      %886 = vmatpush1.msra.mxu0 0.0
      %887 = vmatprep.subr.mxu0 0.0
      %888 = vmatpush1.msra.mxu0 0.0
      %889 = vmatprep.subr.mxu0 0.0
      %890 = vmatpush1.msra.mxu0 0.0
      %891 = vmatprep.subr.mxu0 0.0
      %892 = vmatpush1.msra.mxu0 0.0
      %893 = vmatprep.subr.mxu0 0.0
      %894 = vmatpush1.msra.mxu0 0.0
      %895 = vmatprep.subr.mxu0 0.0
      %896 = vmatpush1.msra.mxu0 0.0
      %897 = vmatprep.subr.mxu0 0.0
      %898 = vmatpush1.msra.mxu0 0.0
      %899 = vmatprep.subr.mxu0 0.0
      %900 = vmatpush1.msra.mxu0 0.0
      %901 = vmatprep.subr.mxu0 0.0
      %902 = vmatpush1.msra.mxu0 0.0
      %903 = vmatprep.subr.mxu0 0.0
      %904 = vmatpush1.msra.mxu0 0.0
      %905 = vmatprep.subr.mxu0 0.0
      %906 = vmatpush1.msra.mxu0 0.0
      %907 = vmatprep.mubr.f32.mxu0 0.0
      %908 = vmatmul.mubr.f32.gmra.mrb[0].mxu0 %v819
      %v909 = vpop.f32.mrb[0].mxu0
      %v910 = vadd.f32 %v841, %v909
      %v911 = vpop.f32.mrb[0].mxu0
      %912 = vdwg.mxu0
      %vm913 = vcmp.ge.f32.partialorder %v910, 0.0
      %v914 = vmul.f32 %v910, 0.1
      %v915 = vsel %vm913, %v910, %v914
      %v916 = vld [vmem:[%s5] sm:$0xff]
      %v917 = vld [vmem:[%s5 + $0x8] sm:$0xff]
      %v918 = vld [vmem:[%s5 + $0x10] sm:$0xff]
      %v919 = vld [vmem:[%s5 + $0x18] sm:$0xff]
      %v920 = vld [vmem:[%s5 + $0x20] sm:$0xff]
      %v921 = vld [vmem:[%s5 + $0x28] sm:$0xff]
      %v922 = vld [vmem:[%s5 + $0x30] sm:$0xff]
      %v923 = vld [vmem:[%s5 + $0x38] sm:$0xff]
      %v924 = vld [vmem:[%s5 + $0x40] sm:$0xff]
      %v925 = vld [vmem:[%s5 + $0x48] sm:$0xff]
      %v926 = vld [vmem:[%s5 + $0x50] sm:$0xff]
      %v927 = vld [vmem:[%s5 + $0x58] sm:$0xff]
      %v928 = vld [vmem:[%s5 + $0x60] sm:$0xff]
      %v929 = vld [vmem:[%s5 + $0x68] sm:$0xff]
      %v930 = vld [vmem:[%s5 + $0x70] sm:$0xff]
      %v931 = vld [vmem:[%s5 + $0x78] sm:$0xff]
      %v932 = vld [vmem:[%s6] sm:$0x1]
      %v934 = vlaneseq
      %v935 = vshrl.u32 %v934, 7
      %v936 = vsub.s32 0, %v935
      %v937 = vrot.slane %v932, %v936
      %939 = vmatprep.subr.mxu0 0.0
      %940 = vmatpush1.msra.mxu0 %v916
      %941 = vmatprep.subr.mxu0 0.0
      %942 = vmatpush1.msra.mxu0 %v917
      %943 = vmatprep.subr.mxu0 0.0
      %944 = vmatpush1.msra.mxu0 %v918
      %945 = vmatprep.subr.mxu0 0.0
      %946 = vmatpush1.msra.mxu0 %v919
      %947 = vmatprep.subr.mxu0 0.0
      %948 = vmatpush1.msra.mxu0 %v920
      %949 = vmatprep.subr.mxu0 0.0
      %950 = vmatpush1.msra.mxu0 %v921
      %951 = vmatprep.subr.mxu0 0.0
      %952 = vmatpush1.msra.mxu0 %v922
      %953 = vmatprep.subr.mxu0 0.0
      %954 = vmatpush1.msra.mxu0 %v923
      %955 = vmatprep.subr.mxu0 0.0
      %956 = vmatpush1.msra.mxu0 %v924
      %957 = vmatprep.subr.mxu0 0.0
      %958 = vmatpush1.msra.mxu0 %v925
      %959 = vmatprep.subr.mxu0 0.0
      %960 = vmatpush1.msra.mxu0 %v926
      %961 = vmatprep.subr.mxu0 0.0
      %962 = vmatpush1.msra.mxu0 %v927
      %963 = vmatprep.subr.mxu0 0.0
      %964 = vmatpush1.msra.mxu0 %v928
      %965 = vmatprep.subr.mxu0 0.0
      %966 = vmatpush1.msra.mxu0 %v929
      %967 = vmatprep.subr.mxu0 0.0
      %968 = vmatpush1.msra.mxu0 %v930
      %969 = vmatprep.subr.mxu0 0.0
      %970 = vmatpush1.msra.mxu0 %v931
      %971 = vmatprep.subr.mxu0 0.0
      %972 = vmatpush1.msra.mxu0 0.0
      %973 = vmatprep.subr.mxu0 0.0
      %974 = vmatpush1.msra.mxu0 0.0
      %975 = vmatprep.subr.mxu0 0.0
      %976 = vmatpush1.msra.mxu0 0.0
      %977 = vmatprep.subr.mxu0 0.0
      %978 = vmatpush1.msra.mxu0 0.0
      %979 = vmatprep.subr.mxu0 0.0
      %980 = vmatpush1.msra.mxu0 0.0
      %981 = vmatprep.subr.mxu0 0.0
      %982 = vmatpush1.msra.mxu0 0.0
      %983 = vmatprep.subr.mxu0 0.0
      %984 = vmatpush1.msra.mxu0 0.0
      %985 = vmatprep.subr.mxu0 0.0
      %986 = vmatpush1.msra.mxu0 0.0
      %987 = vmatprep.subr.mxu0 0.0
      %988 = vmatpush1.msra.mxu0 0.0
      %989 = vmatprep.subr.mxu0 0.0
      %990 = vmatpush1.msra.mxu0 0.0
      %991 = vmatprep.subr.mxu0 0.0
      %992 = vmatpush1.msra.mxu0 0.0
      %993 = vmatprep.subr.mxu0 0.0
      %994 = vmatpush1.msra.mxu0 0.0
      %995 = vmatprep.subr.mxu0 0.0
      %996 = vmatpush1.msra.mxu0 0.0
      %997 = vmatprep.subr.mxu0 0.0
      %998 = vmatpush1.msra.mxu0 0.0
      %999 = vmatprep.subr.mxu0 0.0
      %1000 = vmatpush1.msra.mxu0 0.0
      %1001 = vmatprep.subr.mxu0 0.0
      %1002 = vmatpush1.msra.mxu0 0.0
      %1003 = vmatprep.mubr.f32.mxu0 0.0
      %1004 = vmatmul.mubr.f32.gmra.mrb[0].mxu0 %v915
      %v1005 = vpop.f32.mrb[0].mxu0
      %v1006 = vadd.f32 %v937, %v1005
      %v1007 = vpop.f32.mrb[0].mxu0
      %1008 = vdwg.mxu0
      %1009 = vst [vmem:[#allocation3] sm:$0x3] %v1006
    $region37: #{tpu_custom_call.1} parent=1 // pred_fallthru
      _
    // Predicated region
    $region38: #{tpu_custom_call.1} parent=1 // pred_check
      _
    $region39: #{tpu_custom_call.1} parent=1 // pred_check_branch
      %1011 = sbr.rel (0) target = $region41
    $region40: #{tpu_custom_call.1} parent=1 // pred_region
      %s1013 = ssub.s32 32, 32
      %1014 = vsyncadd [#allocation4], %s1013
      %s1016 = sshll.u32 [#allocation3], 4
      %s1017 = int_to_ptr.vmem [resolvable:$true] %s1016
      %1019 = dma.vmem_to_hbm [thread:$0]  %s1017, 32, %s7, [#allocation4]
    $region41: #{tpu_custom_call.1} parent=1 // pred_fallthru
      _
    // Predicated region
    $region42: #{tpu_custom_call.1} parent=1 // pred_check
      _
    $region43: #{tpu_custom_call.1} parent=1 // pred_check_branch
      %1021 = sbr.rel (0) target = $region45
    $region44: #{tpu_custom_call.1} parent=1 // pred_region
      %1022 = dma.done [#allocation4], 32
    $region45: #{tpu_custom_call.1} parent=1 // pred_fallthru
      _
    %1023 = vsyncpa [#allocation4], 1

</llo_original>
